<compile_context>
chip_gen: v7x
topology: tpu7x:2x2x1
jax: 0.10.0
libtpu: 0.0.40
codegen_flags: <defaults>
</compile_context>

<pallas_src>
import jax
import jax.numpy as jnp
import numpy as np
from jax.experimental import pallas as pl
from jax.experimental.pallas import tpu as pltpu


def _csp2_kernel(x_ref,
                 w1_ref, w2_ref, wu_ref, wb_ref, wtu_ref, wtb_ref,
                 bvec_ref, bt_ref,
                 o_ref):
    # x_ref: (C1, T) f32 ; weights are (c_out, c_in) bf16 ;
    # bvec_ref: (c_p, 4) f32 columns = [b1, b2, bu', bb'] ; bt_ref: (c2, 1) f32.
    x = x_ref[...].astype(w1_ref.dtype)          # single in-kernel f32 -> bf16 cast

    # conv_bottom first so x's live range ends right after CBL#1's matmul.
    # (tie-BN scale/shift already folded into wb / bvec[:,3])
    bot = jnp.dot(wb_ref[...], x, preferred_element_type=jnp.float32)
    bot = bot + bvec_ref[:, 3:4]

    # CBL #1: 1x1 conv (BN folded into weight) -> bias -> SiLU   (f32 math)
    h = jnp.dot(w1_ref[...], x, preferred_element_type=jnp.float32)
    h = h + bvec_ref[:, 0:1]
    h = h * pl.reciprocal(1.0 + jnp.exp(-h), approx=False)

    # CBL #2
    h = jnp.dot(w2_ref[...], h.astype(w2_ref.dtype),
                preferred_element_type=jnp.float32)
    h = h + bvec_ref[:, 1:2]
    h = h * pl.reciprocal(1.0 + jnp.exp(-h), approx=False)

    # conv_up (tie-BN folded in)
    up = jnp.dot(wu_ref[...], h.astype(wu_ref.dtype),
                 preferred_element_type=jnp.float32)
    up = up + bvec_ref[:, 2:3]

    # LeakyReLU(0.01) == max(x, 0.01*x): 2 VPU ops/elem instead of cmp+sel+mul.
    up = jnp.maximum(up, 0.01 * up)
    bot = jnp.maximum(bot, 0.01 * bot)

    # Tie 1x1 conv with its weight split into up/bottom halves (== concat+matmul).
    out = (jnp.dot(wtu_ref[...], up.astype(wtu_ref.dtype),
                   preferred_element_type=jnp.float32)
           + jnp.dot(wtb_ref[...], bot.astype(wtb_ref.dtype),
                     preferred_element_type=jnp.float32)
           + bt_ref[...])
    o_ref[...] = out.astype(o_ref.dtype)


def _fold_bn(gamma, beta, mean, var, eps=1e-5):
    scale = gamma / jnp.sqrt(var + eps)
    shift = beta - mean * scale
    return scale, shift


def _pick_tile(HW, cap):
    """Return (tile_hw, padded_HW). Prefers tiles that divide HW exactly."""
    if HW <= cap:
        return HW, HW                       # single full-extent block, no pad
    if HW % 128 == 0:
        q = HW // 128
        for d in range(cap // 128, 0, -1):  # largest lane-multiple divisor <= cap
            if q % d == 0:
                return 128 * d, HW          # exact tiling, no pad / no slice
    tile = cap                              # rare fallback: pad the tail tile
    return tile, pl.cdiv(HW, tile) * tile


def csp2_n_forward(x_nchw, params, *, tile_hw=1024, out_dtype=jnp.float32):
    """Fused CSP2_n forward (n=1).  x_nchw: (N, c1, H, W) f32, NCHW in/out."""
    N, C1, H, W = x_nchw.shape
    c_ = params["w1"].shape[1]
    c2 = params["wt"].shape[1]
    HW = H * W

    tile, HWp = _pick_tile(HW, tile_hw)

    x3 = x_nchw.reshape(N, C1, HW)           # free bitcast; no dtype cast here
    if HWp != HW:                            # rare fallback only
        x3 = jnp.pad(x3, ((0, 0), (0, 0), (0, HWp - HW)))

    # Fold the eval-mode BatchNorms.
    s1, b1 = _fold_bn(*params["bn1"])
    s2, b2 = _fold_bn(*params["bn2"])
    st, sh_t = _fold_bn(*params["bn_tie"])            # over 2*c_ channels
    stu, stb = st[:c_], st[c_:]
    btu, btb = sh_t[:c_], sh_t[c_:]

    bf16, f32 = jnp.bfloat16, jnp.float32

    # Conv weights stored (in, out); transpose to (out, in) and fold the BN
    # scale of the *following* BN into each weight / bias.
    w1t = (s1[:, None] * params["w1"].T).astype(bf16)            # (c_, C1)
    w2t = (s2[:, None] * params["w2"].T).astype(bf16)            # (c_, c_)
    wut = (stu[:, None] * params["wu"].T).astype(bf16)           # (c_, c_)
    wbt = (stb[:, None] * params["wb"].T).astype(bf16)           # (c_, C1)
    bu_f = stu * params["bu"] + btu                              # (c_,)
    bb_f = stb * params["bb"] + btb                              # (c_,)
    wtu = params["wt"][:c_, :].T.astype(bf16)                    # (c2, c_)
    wtb = params["wt"][c_:, :].T.astype(bf16)                    # (c2, c_)
    bt = params["bt"].reshape(c2, 1).astype(f32)                 # (c2, 1)

    bvec = jnp.stack([b1, b2, bu_f, bb_f], axis=1).astype(f32)   # (c_, 4)

    # Pad the hidden channel count to a sublane multiple (weights only; the
    # zero rows/cols are inert through SiLU / LeakyReLU / the tie matmul).
    c_p = ((c_ + 7) // 8) * 8
    if c_p != c_:
        p = c_p - c_
        w1t = jnp.pad(w1t, ((0, p), (0, 0)))
        wbt = jnp.pad(wbt, ((0, p), (0, 0)))
        w2t = jnp.pad(w2t, ((0, p), (0, p)))
        wut = jnp.pad(wut, ((0, p), (0, p)))
        wtu = jnp.pad(wtu, ((0, 0), (0, p)))
        wtb = jnp.pad(wtb, ((0, 0), (0, p)))
        bvec = jnp.pad(bvec, ((0, p), (0, 0)))

    weights = (w1t, w2t, wut, wbt, wtu, wtb, bvec, bt)

    grid = (N, HWp // tile)
    full2d = lambda a: pl.BlockSpec(a.shape, lambda n, j: (0, 0))
    in_specs = [pl.BlockSpec((None, C1, tile), lambda n, j: (n, 0, j))]
    in_specs += [full2d(a) for a in weights]
    out_spec = pl.BlockSpec((None, c2, tile), lambda n, j: (n, 0, j))

    # VMEM budget from the actual per-step footprint (v7x has only 64 MiB/TC);
    # headroom factor 2, floor 8 MiB, cap 32 MiB.
    out_bytes = np.dtype(out_dtype).itemsize
    est = (2 * C1 * tile * 4                                     # x double-buffer (f32)
           + 2 * c2 * tile * out_bytes                           # out double-buffer
           + 2 * sum(int(a.size) * a.dtype.itemsize for a in weights)
           + 6 * c_p * tile * 4)                                 # live f32 intermediates
    vmem_limit = int(min(max(2 * est, 8 * 2**20), 32 * 2**20))

    out3 = pl.pallas_call(
        _csp2_kernel,
        out_shape=jax.ShapeDtypeStruct((N, c2, HWp), out_dtype),
        grid_spec=pltpu.PrefetchScalarGridSpec(
            num_scalar_prefetch=0,
            grid=grid,
            in_specs=in_specs,
            out_specs=out_spec,
        ),
        compiler_params=pltpu.CompilerParams(
            dimension_semantics=("parallel", "parallel"),
            vmem_limit_bytes=vmem_limit),
    )(x3, *weights)

    if HWp != HW:
        out3 = out3[:, :, :HW]
    return out3.reshape(N, c2, H, W)


def _reference(x_nchw, params):
    """Pure-JAX f32 reference (unfused, unfolded layout math)."""
    N, C1, H, W = x_nchw.shape
    c_ = params["w1"].shape[1]
    x = jnp.transpose(x_nchw, (0, 2, 3, 1)).reshape(-1, C1)
    s1, b1 = _fold_bn(*params["bn1"])
    s2, b2 = _fold_bn(*params["bn2"])
    st, bt_bn = _fold_bn(*params["bn_tie"])
    silu = lambda v: v * jax.nn.sigmoid(v)
    h = silu(x @ params["w1"] * s1 + b1)
    h = silu(h @ params["w2"] * s2 + b2)
    up = h @ params["wu"] + params["bu"]
    bot = x @ params["wb"] + params["bb"]
    total = jnp.concatenate([up, bot], axis=-1)
    t = total * st + bt_bn
    t = jnp.where(t >= 0, t, 0.01 * t)
    out = t @ params["wt"] + params["bt"]
    c2 = params["wt"].shape[1]
    return jnp.transpose(out.reshape(N, H, W, c2), (0, 3, 1, 2))


def _make_params(key, c1, c2, e=0.5):
    c_ = int(c1 * e)
    ks = jax.random.split(key, 16)
    nrm = lambda k, shp: (0.1 * jax.random.normal(k, shp)).astype(jnp.float32)

    def bn_params(k, c):
        k1, k2, k3, k4 = jax.random.split(k, 4)
        gamma = 1.0 + 0.1 * jax.random.normal(k1, (c,))
        beta = 0.1 * jax.random.normal(k2, (c,))
        mean = 0.1 * jax.random.normal(k3, (c,))
        var = jnp.abs(jax.random.normal(k4, (c,))) + 0.5
        return (gamma.astype(jnp.float32), beta.astype(jnp.float32),
                mean.astype(jnp.float32), var.astype(jnp.float32))

    return dict(
        # CBL1 / CBL2 conv weights stored as (in, out)
        w1=nrm(ks[0], (c1, c_)), bn1=bn_params(ks[1], c_),
        w2=nrm(ks[2], (c_, c_)), bn2=bn_params(ks[3], c_),
        # conv_up / conv_bottom (with bias)
        wu=nrm(ks[4], (c_, c_)), bu=nrm(ks[5], (c_,)),
        wb=nrm(ks[6], (c1, c_)), bb=nrm(ks[7], (c_,)),
        # tie: BN(2c_) -> LeakyReLU(0.01) -> Conv(2c_ -> c2, bias)
        bn_tie=bn_params(ks[8], 2 * c_),
        wt=nrm(ks[9], (2 * c_, c2)), bt=nrm(ks[10], (c2,)),
    )


if __name__ == "__main__":
    key = jax.random.PRNGKey(0)
    k_x, k_p = jax.random.split(key)

    N, c1, H, W = 2, 4, 16, 16
    c2 = 4
    x = jax.random.normal(k_x, (N, c1, H, W), dtype=jnp.float32)
    params = _make_params(k_p, c1, c2, e=0.5)

    out = csp2_n_forward(x, params)
    out = jax.block_until_ready(out)

    ref = _reference(x, params)
    assert out.shape == (N, c2, H, W)
    # bf16 weights/activations on the MXU => loosened tolerance.
    assert jnp.allclose(out, ref, atol=2e-2, rtol=2e-2), "mismatch vs reference"

    print("KERNEL_OK")
</pallas_src>

<mosaic_0001>
module attributes {stable_mosaic.version = 11 : i64} {
  func.func @_csp2_kernel(%arg0: i32, %arg1: i32, %arg2: memref<1x4x256xf32, #tpu.memory_space<vmem>>, %arg3: memref<8x4xbf16, #tpu.memory_space<vmem>>, %arg4: memref<8x8xbf16, #tpu.memory_space<vmem>>, %arg5: memref<8x8xbf16, #tpu.memory_space<vmem>>, %arg6: memref<8x4xbf16, #tpu.memory_space<vmem>>, %arg7: memref<4x8xbf16, #tpu.memory_space<vmem>>, %arg8: memref<4x8xbf16, #tpu.memory_space<vmem>>, %arg9: memref<8x4xf32, #tpu.memory_space<vmem>>, %arg10: memref<4x1xf32, #tpu.memory_space<vmem>>, %arg11: memref<1x4x256xf32, #tpu.memory_space<vmem>>) attributes {dimension_semantics = [#tpu.dimension_semantics<parallel>, #tpu.dimension_semantics<parallel>], iteration_bounds = array<i64: 2, 1>, scalar_prefetch = 0 : i64, scratch_operands = 0 : i64, tpu.core_type = #tpu.core_type<tc>, window_params = [{transform_indices = @transform_0, window_bounds = array<i64: 1, 4, 256>}, {pipeline_mode = #tpu.pipeline_mode<synchronous>, transform_indices = @transform_1, window_bounds = array<i64: 8, 4>}, {pipeline_mode = #tpu.pipeline_mode<synchronous>, transform_indices = @transform_2, window_bounds = array<i64: 8, 8>}, {pipeline_mode = #tpu.pipeline_mode<synchronous>, transform_indices = @transform_3, window_bounds = array<i64: 8, 8>}, {pipeline_mode = #tpu.pipeline_mode<synchronous>, transform_indices = @transform_4, window_bounds = array<i64: 8, 4>}, {pipeline_mode = #tpu.pipeline_mode<synchronous>, transform_indices = @transform_5, window_bounds = array<i64: 4, 8>}, {pipeline_mode = #tpu.pipeline_mode<synchronous>, transform_indices = @transform_6, window_bounds = array<i64: 4, 8>}, {pipeline_mode = #tpu.pipeline_mode<synchronous>, transform_indices = @transform_7, window_bounds = array<i64: 8, 4>}, {pipeline_mode = #tpu.pipeline_mode<synchronous>, transform_indices = @transform_8, window_bounds = array<i64: 4, 1>}, {transform_indices = @transform_9, window_bounds = array<i64: 1, 4, 256>}]} {
    %c0 = arith.constant 0 : index
    %c0_0 = arith.constant 0 : index
    %c0_1 = arith.constant 0 : index
    %0 = vector.load %arg2[%c0, %c0_0, %c0_1] : memref<1x4x256xf32, #tpu.memory_space<vmem>>, vector<1x4x256xf32>
    %1 = vector.shape_cast %0 : vector<1x4x256xf32> to vector<4x256xf32>
    %2 = arith.truncf %1 : vector<4x256xf32> to vector<4x256xbf16>
    %c0_2 = arith.constant 0 : index
    %c0_3 = arith.constant 0 : index
    %3 = vector.load %arg6[%c0_2, %c0_3] : memref<8x4xbf16, #tpu.memory_space<vmem>>, vector<8x4xbf16>
    %cst = arith.constant dense<0.000000e+00> : vector<8x256xf32>
    %4 = tpu.matmul %3, %2, %cst {dimension_numbers = #tpu.dot_dimension_numbers<[1], [0], [0], [1], [0, 0, 1, 1], [], []>} : vector<8x4xbf16>, vector<4x256xbf16>, vector<8x256xf32> -> vector<8x256xf32>
    %c0_4 = arith.constant 0 : index
    %c3 = arith.constant 3 : index
    %5 = vector.load %arg9[%c0_4, %c3] : memref<8x4xf32, #tpu.memory_space<vmem>>, vector<8x1xf32>
    %6 = vector.broadcast %5 : vector<8x1xf32> to vector<8x256xf32>
    %7 = arith.addf %4, %6 : vector<8x256xf32>
    %c0_5 = arith.constant 0 : index
    %c0_6 = arith.constant 0 : index
    %8 = vector.load %arg3[%c0_5, %c0_6] : memref<8x4xbf16, #tpu.memory_space<vmem>>, vector<8x4xbf16>
    %cst_7 = arith.constant dense<0.000000e+00> : vector<8x256xf32>
    %9 = tpu.matmul %8, %2, %cst_7 {dimension_numbers = #tpu.dot_dimension_numbers<[1], [0], [0], [1], [0, 0, 1, 1], [], []>} : vector<8x4xbf16>, vector<4x256xbf16>, vector<8x256xf32> -> vector<8x256xf32>
    %c0_8 = arith.constant 0 : index
    %c0_9 = arith.constant 0 : index
    %10 = vector.load %arg9[%c0_8, %c0_9] : memref<8x4xf32, #tpu.memory_space<vmem>>, vector<8x1xf32>
    %11 = vector.broadcast %10 : vector<8x1xf32> to vector<8x256xf32>
    %12 = arith.addf %9, %11 : vector<8x256xf32>
    %cst_10 = arith.constant 0.000000e+00 : f32
    %13 = vector.broadcast %cst_10 : f32 to vector<8x256xf32>
    %14 = arith.subf %13, %12 : vector<8x256xf32>
    %15 = math.exp %14 : vector<8x256xf32>
    %cst_11 = arith.constant 1.000000e+00 : f32
    %16 = vector.broadcast %cst_11 : f32 to vector<8x256xf32>
    %17 = arith.addf %16, %15 : vector<8x256xf32>
    %18 = tpu.reciprocal %17 : vector<8x256xf32> -> vector<8x256xf32>
    %19 = arith.mulf %12, %18 : vector<8x256xf32>
    %c0_12 = arith.constant 0 : index
    %c0_13 = arith.constant 0 : index
    %20 = vector.load %arg4[%c0_12, %c0_13] : memref<8x8xbf16, #tpu.memory_space<vmem>>, vector<8x8xbf16>
    %21 = arith.truncf %19 : vector<8x256xf32> to vector<8x256xbf16>
    %cst_14 = arith.constant dense<0.000000e+00> : vector<8x256xf32>
    %22 = tpu.matmul %20, %21, %cst_14 {dimension_numbers = #tpu.dot_dimension_numbers<[1], [0], [0], [1], [0, 0, 1, 1], [], []>} : vector<8x8xbf16>, vector<8x256xbf16>, vector<8x256xf32> -> vector<8x256xf32>
    %c0_15 = arith.constant 0 : index
    %c1 = arith.constant 1 : index
    %23 = vector.load %arg9[%c0_15, %c1] : memref<8x4xf32, #tpu.memory_space<vmem>>, vector<8x1xf32>
    %24 = vector.broadcast %23 : vector<8x1xf32> to vector<8x256xf32>
    %25 = arith.addf %22, %24 : vector<8x256xf32>
    %cst_16 = arith.constant 0.000000e+00 : f32
    %26 = vector.broadcast %cst_16 : f32 to vector<8x256xf32>
    %27 = arith.subf %26, %25 : vector<8x256xf32>
    %28 = math.exp %27 : vector<8x256xf32>
    %cst_17 = arith.constant 1.000000e+00 : f32
    %29 = vector.broadcast %cst_17 : f32 to vector<8x256xf32>
    %30 = arith.addf %29, %28 : vector<8x256xf32>
    %31 = tpu.reciprocal %30 : vector<8x256xf32> -> vector<8x256xf32>
    %32 = arith.mulf %25, %31 : vector<8x256xf32>
    %c0_18 = arith.constant 0 : index
    %c0_19 = arith.constant 0 : index
    %33 = vector.load %arg5[%c0_18, %c0_19] : memref<8x8xbf16, #tpu.memory_space<vmem>>, vector<8x8xbf16>
    %34 = arith.truncf %32 : vector<8x256xf32> to vector<8x256xbf16>
    %cst_20 = arith.constant dense<0.000000e+00> : vector<8x256xf32>
    %35 = tpu.matmul %33, %34, %cst_20 {dimension_numbers = #tpu.dot_dimension_numbers<[1], [0], [0], [1], [0, 0, 1, 1], [], []>} : vector<8x8xbf16>, vector<8x256xbf16>, vector<8x256xf32> -> vector<8x256xf32>
    %c0_21 = arith.constant 0 : index
    %c2 = arith.constant 2 : index
    %36 = vector.load %arg9[%c0_21, %c2] : memref<8x4xf32, #tpu.memory_space<vmem>>, vector<8x1xf32>
    %37 = vector.broadcast %36 : vector<8x1xf32> to vector<8x256xf32>
    %38 = arith.addf %35, %37 : vector<8x256xf32>
    %cst_22 = arith.constant 0.00999999977 : f32
    %39 = vector.broadcast %cst_22 : f32 to vector<8x256xf32>
    %40 = arith.mulf %39, %38 : vector<8x256xf32>
    %41 = arith.maximumf %38, %40 : vector<8x256xf32>
    %cst_23 = arith.constant 0.00999999977 : f32
    %42 = vector.broadcast %cst_23 : f32 to vector<8x256xf32>
    %43 = arith.mulf %42, %7 : vector<8x256xf32>
    %44 = arith.maximumf %7, %43 : vector<8x256xf32>
    %c0_24 = arith.constant 0 : index
    %c0_25 = arith.constant 0 : index
    %45 = vector.load %arg7[%c0_24, %c0_25] : memref<4x8xbf16, #tpu.memory_space<vmem>>, vector<4x8xbf16>
    %46 = arith.truncf %41 : vector<8x256xf32> to vector<8x256xbf16>
    %cst_26 = arith.constant dense<0.000000e+00> : vector<4x256xf32>
    %47 = tpu.matmul %45, %46, %cst_26 {dimension_numbers = #tpu.dot_dimension_numbers<[1], [0], [0], [1], [0, 0, 1, 1], [], []>} : vector<4x8xbf16>, vector<8x256xbf16>, vector<4x256xf32> -> vector<4x256xf32>
    %c0_27 = arith.constant 0 : index
    %c0_28 = arith.constant 0 : index
    %48 = vector.load %arg8[%c0_27, %c0_28] : memref<4x8xbf16, #tpu.memory_space<vmem>>, vector<4x8xbf16>
    %49 = arith.truncf %44 : vector<8x256xf32> to vector<8x256xbf16>
    %cst_29 = arith.constant dense<0.000000e+00> : vector<4x256xf32>
    %50 = tpu.matmul %48, %49, %cst_29 {dimension_numbers = #tpu.dot_dimension_numbers<[1], [0], [0], [1], [0, 0, 1, 1], [], []>} : vector<4x8xbf16>, vector<8x256xbf16>, vector<4x256xf32> -> vector<4x256xf32>
    %51 = arith.addf %47, %50 : vector<4x256xf32>
    %c0_30 = arith.constant 0 : index
    %c0_31 = arith.constant 0 : index
    %52 = vector.load %arg10[%c0_30, %c0_31] : memref<4x1xf32, #tpu.memory_space<vmem>>, vector<4x1xf32>
    %53 = vector.broadcast %52 : vector<4x1xf32> to vector<4x256xf32>
    %54 = arith.addf %51, %53 : vector<4x256xf32>
    %c0_32 = arith.constant 0 : index
    %c0_33 = arith.constant 0 : index
    %c0_34 = arith.constant 0 : index
    %55 = vector.load %arg11[%c0_32, %c0_33, %c0_34] : memref<1x4x256xf32, #tpu.memory_space<vmem>>, vector<1x4x256xf32>
    %56 = vector.shape_cast %55 : vector<1x4x256xf32> to vector<4x256xf32>
    %57 = vector.shape_cast %54 : vector<4x256xf32> to vector<1x4x256xf32>
    tpu.vector_store %arg11[%c0_32, %c0_33, %c0_34], %57 {strides = array<i32>} : memref<1x4x256xf32, #tpu.memory_space<vmem>>, vector<1x4x256xf32>,
    return
  }
  func.func @transform_0(%arg0: i32, %arg1: i32) -> (i32, i32, i32) {
    %c0_i32 = arith.constant 0 : i32
    %c0_i32_0 = arith.constant 0 : i32
    return %arg0, %c0_i32, %arg1 : i32, i32, i32
  }
  func.func @transform_1(%arg0: i32, %arg1: i32) -> (i32, i32) {
    %c0_i32 = arith.constant 0 : i32
    %c0_i32_0 = arith.constant 0 : i32
    %c0_i32_1 = arith.constant 0 : i32
    return %c0_i32, %c0_i32_0 : i32, i32
  }
  func.func @transform_2(%arg0: i32, %arg1: i32) -> (i32, i32) {
    %c0_i32 = arith.constant 0 : i32
    %c0_i32_0 = arith.constant 0 : i32
    %c0_i32_1 = arith.constant 0 : i32
    return %c0_i32, %c0_i32_0 : i32, i32
  }
  func.func @transform_3(%arg0: i32, %arg1: i32) -> (i32, i32) {
    %c0_i32 = arith.constant 0 : i32
    %c0_i32_0 = arith.constant 0 : i32
    %c0_i32_1 = arith.constant 0 : i32
    return %c0_i32, %c0_i32_0 : i32, i32
  }
  func.func @transform_4(%arg0: i32, %arg1: i32) -> (i32, i32) {
    %c0_i32 = arith.constant 0 : i32
    %c0_i32_0 = arith.constant 0 : i32
    %c0_i32_1 = arith.constant 0 : i32
    return %c0_i32, %c0_i32_0 : i32, i32
  }
  func.func @transform_5(%arg0: i32, %arg1: i32) -> (i32, i32) {
    %c0_i32 = arith.constant 0 : i32
    %c0_i32_0 = arith.constant 0 : i32
    %c0_i32_1 = arith.constant 0 : i32
    return %c0_i32, %c0_i32_0 : i32, i32
  }
  func.func @transform_6(%arg0: i32, %arg1: i32) -> (i32, i32) {
    %c0_i32 = arith.constant 0 : i32
    %c0_i32_0 = arith.constant 0 : i32
    %c0_i32_1 = arith.constant 0 : i32
    return %c0_i32, %c0_i32_0 : i32, i32
  }
  func.func @transform_7(%arg0: i32, %arg1: i32) -> (i32, i32) {
    %c0_i32 = arith.constant 0 : i32
    %c0_i32_0 = arith.constant 0 : i32
    %c0_i32_1 = arith.constant 0 : i32
    return %c0_i32, %c0_i32_0 : i32, i32
  }
  func.func @transform_8(%arg0: i32, %arg1: i32) -> (i32, i32) {
    %c0_i32 = arith.constant 0 : i32
    %c0_i32_0 = arith.constant 0 : i32
    %c0_i32_1 = arith.constant 0 : i32
    return %c0_i32, %c0_i32_0 : i32, i32
  }
  func.func @transform_9(%arg0: i32, %arg1: i32) -> (i32, i32, i32) {
    %c0_i32 = arith.constant 0 : i32
    %c0_i32_0 = arith.constant 0 : i32
    return %arg0, %c0_i32, %arg1 : i32, i32, i32
  }
}

</mosaic_0001>

<llo_original>
// kernel: tpu_custom_call.1
$region0: #{tpu_custom_call.1}
  #allocation0 [shape = 'u32[]', space=smem, size = 0x4, offset = 0x4, fixed_abs, tag = 'smem constant byte address 0x4 - core index']
  #allocation1 [shape = 'u32[144,128]{1,0:T(1,128)}', space=vmem, size = 0x12000, scoped, tag = 'internal scratch']
  %s0 = inlined_call_operand.vmem [shape: f32[2,4,256], index: 0, kind: input, shape index: {}]
  %s1 = inlined_call_operand.vmem [shape: bf16[8,4], index: 1, kind: input, shape index: {}]
  %s2 = inlined_call_operand.vmem [shape: bf16[8,8], index: 2, kind: input, shape index: {}]
  %s3 = inlined_call_operand.vmem [shape: bf16[8,8], index: 3, kind: input, shape index: {}]
  %s4 = inlined_call_operand.vmem [shape: bf16[8,4], index: 4, kind: input, shape index: {}]
  %s5 = inlined_call_operand.vmem [shape: bf16[4,8], index: 5, kind: input, shape index: {}]
  %s6 = inlined_call_operand.vmem [shape: bf16[4,8], index: 6, kind: input, shape index: {}]
  %s7 = inlined_call_operand.vmem [shape: f32[8,4], index: 7, kind: input, shape index: {}]
  %s8 = inlined_call_operand.vmem [shape: f32[4,1], index: 8, kind: input, shape index: {}]
  %s9 = inlined_call_operand.hbm [shape: f32[2,4,256], index: 9, kind: output, shape index: {}]
  %s10 = sld [smem:[#allocation0]]
  $region69: #{tpu_custom_call.1} parent=0
    _
  %s12 = ssub.s32 1, %s10
  %s13 = scalar_select 0, %s12, %s10
  $region1: #{tpu_custom_call.1} parent=0
    #allocation2 [shape = 'u8[8192]{0}', space=vmem, size = 0x2000, scoped, tag = 'output window, operand 0']
    #allocation3 [shape = 's32[2]{0}', space=sflag, size = 0x8, scoped, tag = 'scoped memory for tpu_custom_call.1']
    %14 = vsyncpa [#allocation3], 0
    %s15 = scalar_lea.sflag [#allocation3], 1
    %16 = vsyncpa %s15, 0
    loop: start=0, step=1, limit=4
    $region2: #{tpu_custom_call.1} parent=1 // loop_pre_header
      _
    $region3: #{tpu_custom_call.1} parent=1 // loop_header
      %s18 = sphi 0, %s22
      %p19 = scmp.ge.s32.totalorder %s18, 4
      %s25 = sphi 0, %s37
      %s26 = sphi 0, %s33
      %s27 = sphi 0, %s25
      %s28 = sphi 0, %s26
      %s29 = sphi 0, %s27
      %s30 = sphi 0, %s28
      %s42 = sphi 0, %s44
      %s45 = sphi 0, %s42
      %s46 = sphi 0, %s45
      %s62 = sphi 0, %s46
      %s66 = sphi 0, %s66
      %s68 = sphi 0, %s66
      %s69 = sphi 0, %s68
      %s83 = sphi 0, %s69
      %s87 = sphi 0, %s87
      %s89 = sphi 0, %s87
      %s90 = sphi 0, %s89
      %s104 = sphi 0, %s90
      %s108 = sphi 0, %s108
      %s110 = sphi 0, %s108
      %s111 = sphi 0, %s110
      %s125 = sphi 0, %s111
      %s129 = sphi 0, %s129
      %s131 = sphi 0, %s129
      %s132 = sphi 0, %s131
      %s146 = sphi 0, %s132
      %s150 = sphi 0, %s150
      %s152 = sphi 0, %s150
      %s153 = sphi 0, %s152
      %s167 = sphi 0, %s153
      %s171 = sphi 0, %s171
      %s173 = sphi 0, %s171
      %s174 = sphi 0, %s173
      %s188 = sphi 0, %s174
      %s192 = sphi 0, %s192
      %s194 = sphi 0, %s192
      %s195 = sphi 0, %s194
      %s209 = sphi 0, %s195
      %s213 = sphi 0, %s213
      %s215 = sphi 0, %s213
      %s216 = sphi 0, %s215
      %s230 = sphi 0, %s216
      %s238 = sphi 0, %s240
      %s241 = sphi 0, %s238
      %s242 = sphi 0, %s241
      %s258 = sphi 0, %s242
    $region4: #{tpu_custom_call.1} parent=1 // loop_header_branch
      %21 = sbr.rel (%p19) target = $region8
    $region5: #{tpu_custom_call.1} parent=1 // loop_body
      %s23 = ssub.s32 %s18, 1
      %s24 = ssub.s32 %s18, 2
      %s31 = sadd.s32 1, %s26
      %p32 = scmp.ge.s32.totalorder %s31, 1
      %s33 = scalar_select %p32, 0, %s31
      %s34 = sadd.s32 1, %s25
      %s35 = scalar_select %p32, %s34, %s25
      %p36 = scmp.ge.s32.totalorder %s35, 2
      %s37 = scalar_select %p36, 0, %s35
      %s38 = ssub.s32 %s25, %s37
      %s39 = ssub.s32 %s26, %s33
      %s40 = sor.u32 %s38, %s39
      %p41 = scmp.eq.s32.totalorder %s40, 0
      %s43 = sadd.s32 %s42, 1
      %s44 = scalar_select %p41, %s42, %s43
      %p47 = pneg %p41
      %p48 = scmp.eq.s32.totalorder %s18, 1
      %p49 = por %p47, %p48
      %p50 = scmp.ne.s32.totalorder %s42, %s45
      %p51 = scmp.eq.s32.totalorder %s18, 0
      %p52 = por %p50, %p51
      %p53 = scmp.ne.s32.totalorder %s42, %s45
      %p54 = scmp.eq.s32.totalorder %s23, 1
      %p55 = por %p53, %p54
      %p56 = scmp.ne.s32.totalorder %s45, %s46
      %p57 = scmp.eq.s32.totalorder %s23, 0
      %p58 = por %p56, %p57
      %p59 = scmp.ne.s32.totalorder %s45, %s46
      %p60 = scmp.eq.s32.totalorder %s24, 1
      %p61 = por %p59, %p60
      %p63 = scmp.ne.s32.totalorder %s46, %s62
      %p64 = scmp.eq.s32.totalorder %s24, 0
      %p65 = por %p63, %p64
      %s67 = sadd.s32 %s66, 1
      %p70 = scmp.eq.s32.totalorder %s18, 1
      %p71 = scmp.ne.s32.totalorder %s66, %s68
      %p72 = scmp.eq.s32.totalorder %s18, 0
      %p73 = por %p71, %p72
      %p74 = scmp.ne.s32.totalorder %s66, %s68
      %p75 = scmp.eq.s32.totalorder %s23, 1
      %p76 = por %p74, %p75
      %p77 = scmp.ne.s32.totalorder %s68, %s69
      %p78 = scmp.eq.s32.totalorder %s23, 0
      %p79 = por %p77, %p78
      %p80 = scmp.ne.s32.totalorder %s68, %s69
      %p81 = scmp.eq.s32.totalorder %s24, 1
      %p82 = por %p80, %p81
      %p84 = scmp.ne.s32.totalorder %s69, %s83
      %p85 = scmp.eq.s32.totalorder %s24, 0
      %p86 = por %p84, %p85
      %s88 = sadd.s32 %s87, 1
      %p91 = scmp.eq.s32.totalorder %s18, 1
      %p92 = scmp.ne.s32.totalorder %s87, %s89
      %p93 = scmp.eq.s32.totalorder %s18, 0
      %p94 = por %p92, %p93
      %p95 = scmp.ne.s32.totalorder %s87, %s89
      %p96 = scmp.eq.s32.totalorder %s23, 1
      %p97 = por %p95, %p96
      %p98 = scmp.ne.s32.totalorder %s89, %s90
      %p99 = scmp.eq.s32.totalorder %s23, 0
      %p100 = por %p98, %p99
      %p101 = scmp.ne.s32.totalorder %s89, %s90
      %p102 = scmp.eq.s32.totalorder %s24, 1
      %p103 = por %p101, %p102
      %p105 = scmp.ne.s32.totalorder %s90, %s104
      %p106 = scmp.eq.s32.totalorder %s24, 0
      %p107 = por %p105, %p106
      %s109 = sadd.s32 %s108, 1
      %p112 = scmp.eq.s32.totalorder %s18, 1
      %p113 = scmp.ne.s32.totalorder %s108, %s110
      %p114 = scmp.eq.s32.totalorder %s18, 0
      %p115 = por %p113, %p114
      %p116 = scmp.ne.s32.totalorder %s108, %s110
      %p117 = scmp.eq.s32.totalorder %s23, 1
      %p118 = por %p116, %p117
      %p119 = scmp.ne.s32.totalorder %s110, %s111
      %p120 = scmp.eq.s32.totalorder %s23, 0
      %p121 = por %p119, %p120
      %p122 = scmp.ne.s32.totalorder %s110, %s111
      %p123 = scmp.eq.s32.totalorder %s24, 1
      %p124 = por %p122, %p123
      %p126 = scmp.ne.s32.totalorder %s111, %s125
      %p127 = scmp.eq.s32.totalorder %s24, 0
      %p128 = por %p126, %p127
      %s130 = sadd.s32 %s129, 1
      %p133 = scmp.eq.s32.totalorder %s18, 1
      %p134 = scmp.ne.s32.totalorder %s129, %s131
      %p135 = scmp.eq.s32.totalorder %s18, 0
      %p136 = por %p134, %p135
      %p137 = scmp.ne.s32.totalorder %s129, %s131
      %p138 = scmp.eq.s32.totalorder %s23, 1
      %p139 = por %p137, %p138
      %p140 = scmp.ne.s32.totalorder %s131, %s132
      %p141 = scmp.eq.s32.totalorder %s23, 0
      %p142 = por %p140, %p141
      %p143 = scmp.ne.s32.totalorder %s131, %s132
      %p144 = scmp.eq.s32.totalorder %s24, 1
      %p145 = por %p143, %p144
      %p147 = scmp.ne.s32.totalorder %s132, %s146
      %p148 = scmp.eq.s32.totalorder %s24, 0
      %p149 = por %p147, %p148
      %s151 = sadd.s32 %s150, 1
      %p154 = scmp.eq.s32.totalorder %s18, 1
      %p155 = scmp.ne.s32.totalorder %s150, %s152
      %p156 = scmp.eq.s32.totalorder %s18, 0
      %p157 = por %p155, %p156
      %p158 = scmp.ne.s32.totalorder %s150, %s152
      %p159 = scmp.eq.s32.totalorder %s23, 1
      %p160 = por %p158, %p159
      %p161 = scmp.ne.s32.totalorder %s152, %s153
      %p162 = scmp.eq.s32.totalorder %s23, 0
      %p163 = por %p161, %p162
      %p164 = scmp.ne.s32.totalorder %s152, %s153
      %p165 = scmp.eq.s32.totalorder %s24, 1
      %p166 = por %p164, %p165
      %p168 = scmp.ne.s32.totalorder %s153, %s167
      %p169 = scmp.eq.s32.totalorder %s24, 0
      %p170 = por %p168, %p169
      %s172 = sadd.s32 %s171, 1
      %p175 = scmp.eq.s32.totalorder %s18, 1
      %p176 = scmp.ne.s32.totalorder %s171, %s173
      %p177 = scmp.eq.s32.totalorder %s18, 0
      %p178 = por %p176, %p177
      %p179 = scmp.ne.s32.totalorder %s171, %s173
      %p180 = scmp.eq.s32.totalorder %s23, 1
      %p181 = por %p179, %p180
      %p182 = scmp.ne.s32.totalorder %s173, %s174
      %p183 = scmp.eq.s32.totalorder %s23, 0
      %p184 = por %p182, %p183
      %p185 = scmp.ne.s32.totalorder %s173, %s174
      %p186 = scmp.eq.s32.totalorder %s24, 1
      %p187 = por %p185, %p186
      %p189 = scmp.ne.s32.totalorder %s174, %s188
      %p190 = scmp.eq.s32.totalorder %s24, 0
      %p191 = por %p189, %p190
      %s193 = sadd.s32 %s192, 1
      %p196 = scmp.eq.s32.totalorder %s18, 1
      %p197 = scmp.ne.s32.totalorder %s192, %s194
      %p198 = scmp.eq.s32.totalorder %s18, 0
      %p199 = por %p197, %p198
      %p200 = scmp.ne.s32.totalorder %s192, %s194
      %p201 = scmp.eq.s32.totalorder %s23, 1
      %p202 = por %p200, %p201
      %p203 = scmp.ne.s32.totalorder %s194, %s195
      %p204 = scmp.eq.s32.totalorder %s23, 0
      %p205 = por %p203, %p204
      %p206 = scmp.ne.s32.totalorder %s194, %s195
      %p207 = scmp.eq.s32.totalorder %s24, 1
      %p208 = por %p206, %p207
      %p210 = scmp.ne.s32.totalorder %s195, %s209
      %p211 = scmp.eq.s32.totalorder %s24, 0
      %p212 = por %p210, %p211
      %s214 = sadd.s32 %s213, 1
      %p217 = scmp.eq.s32.totalorder %s18, 1
      %p218 = scmp.ne.s32.totalorder %s213, %s215
      %p219 = scmp.eq.s32.totalorder %s18, 0
      %p220 = por %p218, %p219
      %p221 = scmp.ne.s32.totalorder %s213, %s215
      %p222 = scmp.eq.s32.totalorder %s23, 1
      %p223 = por %p221, %p222
      %p224 = scmp.ne.s32.totalorder %s215, %s216
      %p225 = scmp.eq.s32.totalorder %s23, 0
      %p226 = por %p224, %p225
      %p227 = scmp.ne.s32.totalorder %s215, %s216
      %p228 = scmp.eq.s32.totalorder %s24, 1
      %p229 = por %p227, %p228
      %p231 = scmp.ne.s32.totalorder %s216, %s230
      %p232 = scmp.eq.s32.totalorder %s24, 0
      %p233 = por %p231, %p232
      %s234 = ssub.s32 %s25, %s37
      %s235 = ssub.s32 %s26, %s33
      %s236 = sor.u32 %s234, %s235
      %p237 = scmp.eq.s32.totalorder %s236, 0
      %s239 = sadd.s32 %s238, 1
      %s240 = scalar_select %p237, %s238, %s239
      %p243 = pneg %p237
      %p244 = scmp.eq.s32.totalorder %s18, 1
      %p245 = por %p243, %p244
      %p246 = scmp.ne.s32.totalorder %s238, %s241
      %p247 = scmp.eq.s32.totalorder %s18, 0
      %p248 = por %p246, %p247
      %p249 = scmp.ne.s32.totalorder %s238, %s241
      %p250 = scmp.eq.s32.totalorder %s23, 1
      %p251 = por %p249, %p250
      %p252 = scmp.ne.s32.totalorder %s241, %s242
      %p253 = scmp.eq.s32.totalorder %s23, 0
      %p254 = por %p252, %p253
      %p255 = scmp.ne.s32.totalorder %s241, %s242
      %p256 = scmp.eq.s32.totalorder %s24, 1
      %p257 = por %p255, %p256
      %p259 = scmp.ne.s32.totalorder %s242, %s258
      %p260 = scmp.eq.s32.totalorder %s24, 0
      %p261 = por %p259, %p260
      %p262 = scmp.le.s32.totalorder 1, %s18
      %p263 = scmp.lt.s32.totalorder %s18, 3
      %p264 = pnand %p262, %p263
      %p265 = pneg %p264
      // Predicated region
      $region9: #{tpu_custom_call.1} parent=5 // pred_check
        _
      $region10: #{tpu_custom_call.1} parent=5 // pred_check_branch
        %267 = sbr.rel (%p264) target = $region12
      $region11: #{tpu_custom_call.1} parent=5 // pred_region
        %s268 = ssub.s32 %s18, 1
        // Predicated region
        $region13: #{tpu_custom_call.1} parent=11 // pred_check
          %p269 = pneg %p79
        $region14: #{tpu_custom_call.1} parent=11 // pred_check_branch
          %271 = sbr.rel (%p269) target = $region16
        $region15: #{tpu_custom_call.1} parent=11 // pred_region
          _
        $region16: #{tpu_custom_call.1} parent=11 // pred_fallthru
          _
        // Predicated region
        $region17: #{tpu_custom_call.1} parent=11 // pred_check
          %p272 = pneg %p100
        $region18: #{tpu_custom_call.1} parent=11 // pred_check_branch
          %274 = sbr.rel (%p272) target = $region20
        $region19: #{tpu_custom_call.1} parent=11 // pred_region
          _
        $region20: #{tpu_custom_call.1} parent=11 // pred_fallthru
          _
        // Predicated region
        $region21: #{tpu_custom_call.1} parent=11 // pred_check
          %p275 = pneg %p121
        $region22: #{tpu_custom_call.1} parent=11 // pred_check_branch
          %277 = sbr.rel (%p275) target = $region24
        $region23: #{tpu_custom_call.1} parent=11 // pred_region
          _
        $region24: #{tpu_custom_call.1} parent=11 // pred_fallthru
          _
        // Predicated region
        $region25: #{tpu_custom_call.1} parent=11 // pred_check
          %p278 = pneg %p142
        $region26: #{tpu_custom_call.1} parent=11 // pred_check_branch
          %280 = sbr.rel (%p278) target = $region28
        $region27: #{tpu_custom_call.1} parent=11 // pred_region
          _
        $region28: #{tpu_custom_call.1} parent=11 // pred_fallthru
          _
        // Predicated region
        $region29: #{tpu_custom_call.1} parent=11 // pred_check
          %p281 = pneg %p163
        $region30: #{tpu_custom_call.1} parent=11 // pred_check_branch
          %283 = sbr.rel (%p281) target = $region32
        $region31: #{tpu_custom_call.1} parent=11 // pred_region
          _
        $region32: #{tpu_custom_call.1} parent=11 // pred_fallthru
          _
        // Predicated region
        $region33: #{tpu_custom_call.1} parent=11 // pred_check
          %p284 = pneg %p184
        $region34: #{tpu_custom_call.1} parent=11 // pred_check_branch
          %286 = sbr.rel (%p284) target = $region36
        $region35: #{tpu_custom_call.1} parent=11 // pred_region
          _
        $region36: #{tpu_custom_call.1} parent=11 // pred_fallthru
          _
        // Predicated region
        $region37: #{tpu_custom_call.1} parent=11 // pred_check
          %p287 = pneg %p205
        $region38: #{tpu_custom_call.1} parent=11 // pred_check_branch
          %289 = sbr.rel (%p287) target = $region40
        $region39: #{tpu_custom_call.1} parent=11 // pred_region
          _
        $region40: #{tpu_custom_call.1} parent=11 // pred_fallthru
          _
        // Predicated region
        $region41: #{tpu_custom_call.1} parent=11 // pred_check
          %p290 = pneg %p226
        $region42: #{tpu_custom_call.1} parent=11 // pred_check_branch
          %292 = sbr.rel (%p290) target = $region44
        $region43: #{tpu_custom_call.1} parent=11 // pred_region
          _
        $region44: #{tpu_custom_call.1} parent=11 // pred_fallthru
          _
      $region12: #{tpu_custom_call.1} parent=5 // pred_fallthru
        _
      %p293 = scmp.lt.s32.totalorder %s18, 2
      // Predicated region
      $region45: #{tpu_custom_call.1} parent=5 // pred_check
        %p294 = pneg %p293
      $region46: #{tpu_custom_call.1} parent=5 // pred_check_branch
        %296 = sbr.rel (%p294) target = $region48
      $region47: #{tpu_custom_call.1} parent=5 // pred_region
        // Predicated region
        $region49: #{tpu_custom_call.1} parent=47 // pred_check
          %p297 = pneg %p52
        $region50: #{tpu_custom_call.1} parent=47 // pred_check_branch
          %299 = sbr.rel (%p297) target = $region52
        $region51: #{tpu_custom_call.1} parent=47 // pred_region
          %s300 = smul.u32 2, %s26
          %p301 = scmp.lt.s32.totalorder %s25, 1
          %s302 = scalar_select %p301, %s25, 1
          %p303 = scmp.lt.s32.totalorder %s300, 1
          %s304 = scalar_select %p303, %s300, 1
          %s305 = smul.addr %s302, 2
          %s306 = sadd.s32 %s304, %s305
          %s307 = smul.addr %s306, 4
          %s308 = scalar_lea.vmem %s0, %s307
          %s309 = smul.u32 2, %s26
        $region52: #{tpu_custom_call.1} parent=47 // pred_fallthru
          _
      $region48: #{tpu_custom_call.1} parent=5 // pred_fallthru
        _
      %p310 = scmp.le.s32.totalorder 1, %s18
      %p311 = scmp.lt.s32.totalorder %s18, 3
      %p312 = pnand %p310, %p311
      %p313 = pneg %p312
      // Predicated region
      $region53: #{tpu_custom_call.1} parent=5 // pred_check
        _
      $region54: #{tpu_custom_call.1} parent=5 // pred_check_branch
        %315 = sbr.rel (%p312) target = $region56
      $region55: #{tpu_custom_call.1} parent=5 // pred_region
        %s316 = ssub.s32 %s18, 1
        %s317 = smul.u32 2, %s28
        %p318 = scmp.lt.s32.totalorder %s27, 1
        %s319 = scalar_select %p318, %s27, 1
        %p320 = scmp.lt.s32.totalorder %s317, 1
        %s321 = scalar_select %p320, %s317, 1
        %s322 = smul.addr %s319, 2
        %s323 = sadd.s32 %s321, %s322
        %s324 = smul.addr %s323, 4
        %s325 = scalar_lea.vmem %s0, %s324
        %p326 = pneg %p58
        %p327 = pneg %p55
        %p328 = pneg %p79
        %p329 = pneg %p76
        %p330 = pneg %p100
        %p331 = pneg %p97
        %p332 = pneg %p121
        %p333 = pneg %p118
        %p334 = pneg %p142
        %p335 = pneg %p139
        %p336 = pneg %p163
        %p337 = pneg %p160
        %p338 = pneg %p184
        %p339 = pneg %p181
        %p340 = pneg %p205
        %p341 = pneg %p202
        %p342 = pneg %p226
        %p343 = pneg %p223
        %p344 = pneg %p254
        %p345 = pneg %p251
        %s346 = sand.u32 %s241, 1
        %s347 = scalar_lea.sflag [#allocation3], %s346
        %s348 = sand.u32 %s241, 1
        %s349 = smul.addr %s348, 8
        %s350 = scalar_lea.vmem [#allocation2], %s349
        %s351 = smul.u32 2, %s28
        %p352 = scmp.lt.s32.totalorder %s27, 1
        %s353 = scalar_select %p352, %s27, 1
        %p354 = scmp.lt.s32.totalorder %s351, 1
        %s355 = scalar_select %p354, %s351, 1
        %s356 = smul.addr %s353, 2
        %s357 = sadd.s32 %s355, %s356
        %s358 = smul.addr %s357, 4
        %s359 = scalar_lea.vmem %s0, %s358
        %s360 = smul.u32 2, %s28
        %s361 = smul.u32 2, %s28
        %v363 = vld [vmem:[%s359] sm:$0xff]
        %v365 = vcombine.high %v363, %v363
        %v367 = vpack.c.bf16 %v363, %v363
        %v368 = vpack.c.bf16 %v365, %v365
        %v369 = vld [vmem:[%s4] sm:$0xf]
        %v370 = vld [vmem:[%s7] sm:$0xff]
        %372 = vset.pattern.permute.xlu0 3
        %373 = vperm.xlu0 %372, %v370
        %v374 = vpop.permute.xlu0 %373
        %vm376 = vcmask 31744
        %v378 = vsel %vm376, %v369, 0
        %vm380 = vcmask 1041408
        %v382 = vsel %vm380, %v367, 0
        %v385 = vsel %vm380, %v368, 0
        %387 = vmatprep.subr.bf16.mxu0 %v385
        %388 = vmatpush1.bf16.msra.mxu0 %v382
        %389 = vmatprep.subr.bf16.mxu0 0
        %390 = vmatpush1.bf16.msra.mxu0 0
        %391 = vmatprep.subr.bf16.mxu0 0
        %392 = vmatpush1.bf16.msra.mxu0 0
        %393 = vmatprep.subr.bf16.mxu0 0
        %394 = vmatpush1.bf16.msra.mxu0 0
        %395 = vmatprep.subr.bf16.mxu0 0
        %396 = vmatpush1.bf16.msra.mxu0 0
        %397 = vmatprep.subr.bf16.mxu0 0
        %398 = vmatpush1.bf16.msra.mxu0 0
        %399 = vmatprep.subr.bf16.mxu0 0
        %400 = vmatpush1.bf16.msra.mxu0 0
        %401 = vmatprep.subr.bf16.mxu0 0
        %402 = vmatpush1.bf16.msra.mxu0 0
        %403 = vmatprep.subr.bf16.mxu0 0
        %404 = vmatpush1.bf16.msra.mxu0 0
        %405 = vmatprep.subr.bf16.mxu0 0
        %406 = vmatpush1.bf16.msra.mxu0 0
        %407 = vmatprep.subr.bf16.mxu0 0
        %408 = vmatpush1.bf16.msra.mxu0 0
        %409 = vmatprep.subr.bf16.mxu0 0
        %410 = vmatpush1.bf16.msra.mxu0 0
        %411 = vmatprep.subr.bf16.mxu0 0
        %412 = vmatpush1.bf16.msra.mxu0 0
        %413 = vmatprep.subr.bf16.mxu0 0
        %414 = vmatpush1.bf16.msra.mxu0 0
        %415 = vmatprep.subr.bf16.mxu0 0
        %416 = vmatpush1.bf16.msra.mxu0 0
        %417 = vmatprep.subr.bf16.mxu0 0
        %418 = vmatpush1.bf16.msra.mxu0 0
        %419 = vmatprep.mubr.bf16.mxu0 0
        %420 = vmatmul.mubr.bf16.gmra.mrb[0].mxu0 %v378
        %v421 = vpop.f32.mrb[0].mxu0
        %v422 = vadd.f32 %v374, %v421
        %v423 = vpop.f32.mrb[0].mxu0
        %v424 = vadd.f32 %v374, %v423
        %v425 = vpop.f32.mrb[0].mxu0
        %v426 = vpop.f32.mrb[0].mxu0
        %427 = vdwg.mxu0
        %v428 = vld [vmem:[%s1] sm:$0xf]
        %429 = vset.pattern.permute.xlu0 0
        %430 = vperm.xlu0 %429, %v370
        %v431 = vpop.permute.xlu0 %430
        %v434 = vsel %vm376, %v428, 0
        %436 = vmatprep.subr.bf16.mxu0 %v385
        %437 = vmatpush1.bf16.msra.mxu0 %v382
        %438 = vmatprep.subr.bf16.mxu0 0
        %439 = vmatpush1.bf16.msra.mxu0 0
        %440 = vmatprep.subr.bf16.mxu0 0
        %441 = vmatpush1.bf16.msra.mxu0 0
        %442 = vmatprep.subr.bf16.mxu0 0
        %443 = vmatpush1.bf16.msra.mxu0 0
        %444 = vmatprep.subr.bf16.mxu0 0
        %445 = vmatpush1.bf16.msra.mxu0 0
        %446 = vmatprep.subr.bf16.mxu0 0
        %447 = vmatpush1.bf16.msra.mxu0 0
        %448 = vmatprep.subr.bf16.mxu0 0
        %449 = vmatpush1.bf16.msra.mxu0 0
        %450 = vmatprep.subr.bf16.mxu0 0
        %451 = vmatpush1.bf16.msra.mxu0 0
        %452 = vmatprep.subr.bf16.mxu0 0
        %453 = vmatpush1.bf16.msra.mxu0 0
        %454 = vmatprep.subr.bf16.mxu0 0
        %455 = vmatpush1.bf16.msra.mxu0 0
        %456 = vmatprep.subr.bf16.mxu0 0
        %457 = vmatpush1.bf16.msra.mxu0 0
        %458 = vmatprep.subr.bf16.mxu0 0
        %459 = vmatpush1.bf16.msra.mxu0 0
        %460 = vmatprep.subr.bf16.mxu0 0
        %461 = vmatpush1.bf16.msra.mxu0 0
        %462 = vmatprep.subr.bf16.mxu0 0
        %463 = vmatpush1.bf16.msra.mxu0 0
        %464 = vmatprep.subr.bf16.mxu0 0
        %465 = vmatpush1.bf16.msra.mxu0 0
        %466 = vmatprep.subr.bf16.mxu0 0
        %467 = vmatpush1.bf16.msra.mxu0 0
        %468 = vmatprep.mubr.bf16.mxu0 0
        %469 = vmatmul.mubr.bf16.gmra.mrb[0].mxu0 %v434
        %v470 = vpop.f32.mrb[0].mxu0
        %v471 = vadd.f32 %v431, %v470
        %v472 = vpop.f32.mrb[0].mxu0
        %v473 = vadd.f32 %v431, %v472
        %v474 = vpop.f32.mrb[0].mxu0
        %v475 = vpop.f32.mrb[0].mxu0
        %476 = vdwg.mxu0
        %v477 = vsub.f32 0.0, %v471
        %v478 = vsub.f32 0.0, %v473
        %v479 = vmul.f32 %v477, 1.442695
        %v480 = vpow.pop %v479
        %v481 = vmul.f32 %v478, 1.442695
        %v482 = vpow.pop %v481
        %v483 = vadd.f32 %v480, 1.0
        %v484 = vadd.f32 %v482, 1.0
        %v485 = vrcp.pop %v483
        %v486 = vrcp.pop %v484
        %v487 = vmul.f32 %v471, %v485
        %v488 = vmul.f32 %v473, %v486
        %v489 = vld [vmem:[%s2] sm:$0xf]
        %v490 = vpack.c.bf16 %v487, %v487
        %v491 = vpack.c.bf16 %v488, %v488
        %492 = vset.pattern.permute.xlu0 1
        %493 = vperm.xlu0 %492, %v370
        %v494 = vpop.permute.xlu0 %493
        %vm496 = vcmask 64512
        %v498 = vsel %vm496, %v489, 0
        %vm500 = vcmask 1043456
        %v502 = vsel %vm500, %v490, 0
        %v505 = vsel %vm500, %v491, 0
        %507 = vmatprep.subr.bf16.mxu0 %v505
        %508 = vmatpush1.bf16.msra.mxu0 %v502
        %509 = vmatprep.subr.bf16.mxu0 0
        %510 = vmatpush1.bf16.msra.mxu0 0
        %511 = vmatprep.subr.bf16.mxu0 0
        %512 = vmatpush1.bf16.msra.mxu0 0
        %513 = vmatprep.subr.bf16.mxu0 0
        %514 = vmatpush1.bf16.msra.mxu0 0
        %515 = vmatprep.subr.bf16.mxu0 0
        %516 = vmatpush1.bf16.msra.mxu0 0
        %517 = vmatprep.subr.bf16.mxu0 0
        %518 = vmatpush1.bf16.msra.mxu0 0
        %519 = vmatprep.subr.bf16.mxu0 0
        %520 = vmatpush1.bf16.msra.mxu0 0
        %521 = vmatprep.subr.bf16.mxu0 0
        %522 = vmatpush1.bf16.msra.mxu0 0
        %523 = vmatprep.subr.bf16.mxu0 0
        %524 = vmatpush1.bf16.msra.mxu0 0
        %525 = vmatprep.subr.bf16.mxu0 0
        %526 = vmatpush1.bf16.msra.mxu0 0
        %527 = vmatprep.subr.bf16.mxu0 0
        %528 = vmatpush1.bf16.msra.mxu0 0
        %529 = vmatprep.subr.bf16.mxu0 0
        %530 = vmatpush1.bf16.msra.mxu0 0
        %531 = vmatprep.subr.bf16.mxu0 0
        %532 = vmatpush1.bf16.msra.mxu0 0
        %533 = vmatprep.subr.bf16.mxu0 0
        %534 = vmatpush1.bf16.msra.mxu0 0
        %535 = vmatprep.subr.bf16.mxu0 0
        %536 = vmatpush1.bf16.msra.mxu0 0
        %537 = vmatprep.subr.bf16.mxu0 0
        %538 = vmatpush1.bf16.msra.mxu0 0
        %539 = vmatprep.mubr.bf16.mxu0 0
        %540 = vmatmul.mubr.bf16.gmra.mrb[0].mxu0 %v498
        %v541 = vpop.f32.mrb[0].mxu0
        %v542 = vadd.f32 %v494, %v541
        %v543 = vpop.f32.mrb[0].mxu0
        %v544 = vadd.f32 %v494, %v543
        %v545 = vpop.f32.mrb[0].mxu0
        %v546 = vpop.f32.mrb[0].mxu0
        %547 = vdwg.mxu0
        %v548 = vsub.f32 0.0, %v542
        %v549 = vsub.f32 0.0, %v544
        %v550 = vmul.f32 %v548, 1.442695
        %v551 = vpow.pop %v550
        %v552 = vmul.f32 %v549, 1.442695
        %v553 = vpow.pop %v552
        %v554 = vadd.f32 %v551, 1.0
        %v555 = vadd.f32 %v553, 1.0
        %v556 = vrcp.pop %v554
        %v557 = vrcp.pop %v555
        %v558 = vmul.f32 %v542, %v556
        %v559 = vmul.f32 %v544, %v557
        %v560 = vld [vmem:[%s3] sm:$0xf]
        %v561 = vpack.c.bf16 %v558, %v558
        %v562 = vpack.c.bf16 %v559, %v559
        %563 = vset.pattern.permute.xlu0 2
        %564 = vperm.xlu0 %563, %v370
        %v565 = vpop.permute.xlu0 %564
        %v568 = vsel %vm496, %v560, 0
        %v571 = vsel %vm500, %v561, 0
        %v574 = vsel %vm500, %v562, 0
        %576 = vmatprep.subr.bf16.mxu0 %v574
        %577 = vmatpush1.bf16.msra.mxu0 %v571
        %578 = vmatprep.subr.bf16.mxu0 0
        %579 = vmatpush1.bf16.msra.mxu0 0
        %580 = vmatprep.subr.bf16.mxu0 0
        %581 = vmatpush1.bf16.msra.mxu0 0
        %582 = vmatprep.subr.bf16.mxu0 0
        %583 = vmatpush1.bf16.msra.mxu0 0
        %584 = vmatprep.subr.bf16.mxu0 0
        %585 = vmatpush1.bf16.msra.mxu0 0
        %586 = vmatprep.subr.bf16.mxu0 0
        %587 = vmatpush1.bf16.msra.mxu0 0
        %588 = vmatprep.subr.bf16.mxu0 0
        %589 = vmatpush1.bf16.msra.mxu0 0
        %590 = vmatprep.subr.bf16.mxu0 0
        %591 = vmatpush1.bf16.msra.mxu0 0
        %592 = vmatprep.subr.bf16.mxu0 0
        %593 = vmatpush1.bf16.msra.mxu0 0
        %594 = vmatprep.subr.bf16.mxu0 0
        %595 = vmatpush1.bf16.msra.mxu0 0
        %596 = vmatprep.subr.bf16.mxu0 0
        %597 = vmatpush1.bf16.msra.mxu0 0
        %598 = vmatprep.subr.bf16.mxu0 0
        %599 = vmatpush1.bf16.msra.mxu0 0
        %600 = vmatprep.subr.bf16.mxu0 0
        %601 = vmatpush1.bf16.msra.mxu0 0
        %602 = vmatprep.subr.bf16.mxu0 0
        %603 = vmatpush1.bf16.msra.mxu0 0
        %604 = vmatprep.subr.bf16.mxu0 0
        %605 = vmatpush1.bf16.msra.mxu0 0
        %606 = vmatprep.subr.bf16.mxu0 0
        %607 = vmatpush1.bf16.msra.mxu0 0
        %608 = vmatprep.mubr.bf16.mxu0 0
        %609 = vmatmul.mubr.bf16.gmra.mrb[0].mxu0 %v568
        %v610 = vpop.f32.mrb[0].mxu0
        %v611 = vadd.f32 %v565, %v610
        %v612 = vpop.f32.mrb[0].mxu0
        %v613 = vadd.f32 %v565, %v612
        %v614 = vpop.f32.mrb[0].mxu0
        %v615 = vpop.f32.mrb[0].mxu0
        %616 = vdwg.mxu0
        %v617 = vmul.f32 %v611, 0.01
        %v618 = vmul.f32 %v613, 0.01
        %v619 = vmax.f32 %v611, %v617
        %v620 = vmax.f32 %v613, %v618
        %v621 = vmul.f32 %v422, 0.01
        %v622 = vmul.f32 %v424, 0.01
        %v623 = vmax.f32 %v422, %v621
        %v624 = vmax.f32 %v424, %v622
        %v625 = vld [vmem:[%s5] sm:$0x3]
        %v626 = vpack.c.bf16 %v619, %v619
        %v627 = vpack.c.bf16 %v620, %v620
        %v628 = vld [vmem:[%s6] sm:$0x3]
        %v629 = vpack.c.bf16 %v623, %v623
        %v630 = vpack.c.bf16 %v624, %v624
        %v632 = vsel %vm496, %v628, 0
        %v635 = vsel %vm500, %v629, 0
        %v638 = vsel %vm500, %v630, 0
        %640 = vmatprep.subr.bf16.mxu0 %v638
        %641 = vmatpush1.bf16.msra.mxu0 %v635
        %642 = vmatprep.subr.bf16.mxu0 0
        %643 = vmatpush1.bf16.msra.mxu0 0
        %644 = vmatprep.subr.bf16.mxu0 0
        %645 = vmatpush1.bf16.msra.mxu0 0
        %646 = vmatprep.subr.bf16.mxu0 0
        %647 = vmatpush1.bf16.msra.mxu0 0
        %648 = vmatprep.subr.bf16.mxu0 0
        %649 = vmatpush1.bf16.msra.mxu0 0
        %650 = vmatprep.subr.bf16.mxu0 0
        %651 = vmatpush1.bf16.msra.mxu0 0
        %652 = vmatprep.subr.bf16.mxu0 0
        %653 = vmatpush1.bf16.msra.mxu0 0
        %654 = vmatprep.subr.bf16.mxu0 0
        %655 = vmatpush1.bf16.msra.mxu0 0
        %656 = vmatprep.subr.bf16.mxu0 0
        %657 = vmatpush1.bf16.msra.mxu0 0
        %658 = vmatprep.subr.bf16.mxu0 0
        %659 = vmatpush1.bf16.msra.mxu0 0
        %660 = vmatprep.subr.bf16.mxu0 0
        %661 = vmatpush1.bf16.msra.mxu0 0
        %662 = vmatprep.subr.bf16.mxu0 0
        %663 = vmatpush1.bf16.msra.mxu0 0
        %664 = vmatprep.subr.bf16.mxu0 0
        %665 = vmatpush1.bf16.msra.mxu0 0
        %666 = vmatprep.subr.bf16.mxu0 0
        %667 = vmatpush1.bf16.msra.mxu0 0
        %668 = vmatprep.subr.bf16.mxu0 0
        %669 = vmatpush1.bf16.msra.mxu0 0
        %670 = vmatprep.subr.bf16.mxu0 0
        %671 = vmatpush1.bf16.msra.mxu0 0
        %672 = vmatprep.mubr.bf16.mxu0 0
        %673 = vmatmul.mubr.bf16.gmra.mrb[0].mxu0 %v632
        %v674 = vpop.f32.mrb[0].mxu0
        %v675 = vadd.f32 0.0, %v674
        %v676 = vpop.f32.mrb[0].mxu0
        %v677 = vadd.f32 0.0, %v676
        %v678 = vpop.f32.mrb[0].mxu0
        %v679 = vpop.f32.mrb[0].mxu0
        %680 = vdwg.mxu0
        %v682 = vsel %vm496, %v625, 0
        %v685 = vsel %vm500, %v626, 0
        %v688 = vsel %vm500, %v627, 0
        %690 = vmatprep.subr.bf16.mxu0 %v688
        %691 = vmatpush1.bf16.msra.mxu0 %v685
        %692 = vmatprep.subr.bf16.mxu0 0
        %693 = vmatpush1.bf16.msra.mxu0 0
        %694 = vmatprep.subr.bf16.mxu0 0
        %695 = vmatpush1.bf16.msra.mxu0 0
        %696 = vmatprep.subr.bf16.mxu0 0
        %697 = vmatpush1.bf16.msra.mxu0 0
        %698 = vmatprep.subr.bf16.mxu0 0
        %699 = vmatpush1.bf16.msra.mxu0 0
        %700 = vmatprep.subr.bf16.mxu0 0
        %701 = vmatpush1.bf16.msra.mxu0 0
        %702 = vmatprep.subr.bf16.mxu0 0
        %703 = vmatpush1.bf16.msra.mxu0 0
        %704 = vmatprep.subr.bf16.mxu0 0
        %705 = vmatpush1.bf16.msra.mxu0 0
        %706 = vmatprep.subr.bf16.mxu0 0
        %707 = vmatpush1.bf16.msra.mxu0 0
        %708 = vmatprep.subr.bf16.mxu0 0
        %709 = vmatpush1.bf16.msra.mxu0 0
        %710 = vmatprep.subr.bf16.mxu0 0
        %711 = vmatpush1.bf16.msra.mxu0 0
        %712 = vmatprep.subr.bf16.mxu0 0
        %713 = vmatpush1.bf16.msra.mxu0 0
        %714 = vmatprep.subr.bf16.mxu0 0
        %715 = vmatpush1.bf16.msra.mxu0 0
        %716 = vmatprep.subr.bf16.mxu0 0
        %717 = vmatpush1.bf16.msra.mxu0 0
        %718 = vmatprep.subr.bf16.mxu0 0
        %719 = vmatpush1.bf16.msra.mxu0 0
        %720 = vmatprep.subr.bf16.mxu0 0
        %721 = vmatpush1.bf16.msra.mxu0 0
        %722 = vmatprep.mubr.bf16.mxu0 0
        %723 = vmatmul.mubr.bf16.gmra.mrb[0].mxu0 %v682
        %v724 = vpop.f32.mrb[0].mxu0
        %v725 = vadd.f32 %v675, %v724
        %v726 = vpop.f32.mrb[0].mxu0
        %v727 = vadd.f32 %v677, %v726
        %v728 = vpop.f32.mrb[0].mxu0
        %v729 = vpop.f32.mrb[0].mxu0
        %730 = vdwg.mxu0
        %v731 = vld [vmem:[%s8] sm:$0xf]
        %733 = vset.pattern.permute.xlu0 0
        %734 = vperm.xlu0 %733, %v731
        %v735 = vpop.permute.xlu0 %734
        %v737 = vadd.f32 %v725, %v735
        %v738 = vadd.f32 %v727, %v735
        %v741 = vcombine.low %v737, %v738
        %743 = vst [vmem:[%s350] sm:$0xff] %v741
        %s744 = sand.u32 %s241, 1
        %s745 = scalar_lea.sflag [#allocation3], %s744
        %s746 = sand.u32 %s241, 1
        %s747 = smul.addr %s746, 8
        %s748 = scalar_lea.vmem [#allocation2], %s747
        // Predicated region
        $region57: #{tpu_custom_call.1} parent=55 // pred_check
          %p749 = pneg %p251
        $region58: #{tpu_custom_call.1} parent=55 // pred_check_branch
          %751 = sbr.rel (%p749) target = $region60
        $region59: #{tpu_custom_call.1} parent=55 // pred_region
          %s752 = smul.u32 2, %s28
          %s754 = ssub.s32 128, 128
          %755 = vsyncadd %s745, %s754
          %s756 = smul.addr %s27, 2
          %s757 = sadd.s32 %s752, %s756
          %s758 = smul.addr %s757, 64
          %s759 = scalar_lea.hbm %s9, %s758
          %s761 = sshll.u32 %s748, 4
          %s762 = int_to_ptr.vmem [resolvable:$true] %s761
          %764 = dma.vmem_to_hbm [thread:$0]  %s762, 128, %s759, %s745
        $region60: #{tpu_custom_call.1} parent=55 // pred_fallthru
          _
      $region56: #{tpu_custom_call.1} parent=5 // pred_fallthru
        _
      %p765 = scmp.le.s32.totalorder 2, %s18
      // Predicated region
      $region61: #{tpu_custom_call.1} parent=5 // pred_check
        %p766 = pneg %p765
      $region62: #{tpu_custom_call.1} parent=5 // pred_check_branch
        %768 = sbr.rel (%p766) target = $region64
      $region63: #{tpu_custom_call.1} parent=5 // pred_region
        %s769 = ssub.s32 %s18, 2
        // Predicated region
        $region65: #{tpu_custom_call.1} parent=63 // pred_check
          %p770 = pneg %p257
        $region66: #{tpu_custom_call.1} parent=63 // pred_check_branch
          %772 = sbr.rel (%p770) target = $region68
        $region67: #{tpu_custom_call.1} parent=63 // pred_region
          %s773 = sand.u32 %s242, 1
          %s774 = scalar_lea.sflag [#allocation3], %s773
          %s775 = sand.u32 %s242, 1
          %s776 = smul.addr %s775, 8
          %s777 = scalar_lea.vmem [#allocation2], %s776
          %778 = dma.done %s774, 128
        $region68: #{tpu_custom_call.1} parent=63 // pred_fallthru
          _
      $region64: #{tpu_custom_call.1} parent=5 // pred_fallthru
        _
    $region6: #{tpu_custom_call.1} parent=1 // loop_footer
      %s22 = sadd.s32 1, %s18
    $region7: #{tpu_custom_call.1} parent=1 // loop_footer_branch
      %17 = sbr.rel target = $region3
    $region8: #{tpu_custom_call.1} parent=1 // loop_exit
      _
    %779 = vsyncpa [#allocation3], 1
    %s780 = scalar_lea.sflag [#allocation3], 1
    %781 = vsyncpa %s780, 1

</llo_original>
